<compile_context>
chip_gen: v7x
topology: tpu7x:2x2x1
jax: 0.10.0
libtpu: 0.0.40
codegen_flags: <defaults>
</compile_context>

<pallas_src>
import jax
import jax.numpy as jnp
from jax.experimental import pallas as pl
from jax.experimental.pallas import tpu as pltpu


def cpam_dec_kernel(x_ref, wq_ref, bq_ref, k_ref, v_ref, mask_ref, scale_ref, o_ref):
    x = x_ref[0]                      # (C, T_HW)    channels-first spatial tile (io dtype)
    wq = wq_ref[...]                  # (C/4, C)     1x1-conv weight (mxu dtype)
    k = k_ref[0]                      # (K_pad, C/4) precomputed proj_key (mxu dtype)
    v = v_ref[0]                      # (C, K_pad)   precomputed proj_value (mxu dtype)

    # proj_query (channels-first): (C/4, T_HW) = Wq @ x + bq, f32 accumulation.
    q = jnp.dot(wq, x.astype(wq.dtype), preferred_element_type=jnp.float32) + bq_ref[...]

    # energy^T: (K_pad, T_HW); softmax over K (axis 0).  Padded centers get a
    # precomputed -1e30 additive bias so exp underflows to exactly 0.
    energy = jnp.dot(k, q.astype(k.dtype),
                     preferred_element_type=jnp.float32) + mask_ref[...]
    m = jnp.max(energy, axis=0, keepdims=True)
    e = jnp.exp(energy - m)
    att = e * pl.reciprocal(jnp.sum(e, axis=0, keepdims=True), approx=True)

    # out (channels-first): (C, T_HW) = proj_value @ attention^T, fused residual.
    out = jnp.dot(v, att.astype(v.dtype), preferred_element_type=jnp.float32)
    o_ref[0] = (scale_ref[0, 0] * out + x.astype(jnp.float32)).astype(o_ref.dtype)


def _choose_hw_tiling(hw, n_batch, target):
    """Pick (t_hw, hw_pad): t_hw is a multiple of 128 (HW zero-padded if needed)
    or the full HW extent -> output blocks stay lane-dense (no masked vst)."""
    target = max(128, (target // 128) * 128)
    if hw <= target:
        t_hw, hw_pad = hw, hw
    else:
        t_hw = 0
        for cand in range(target, 127, -128):
            if hw % cand == 0:
                t_hw = cand
                break
        if t_hw == 0:                       # no 128-multiple divisor <= target: pad HW
            t_hw = target
            hw_pad = pl.cdiv(hw, t_hw) * t_hw
        else:
            hw_pad = hw
    # >= 2 grid steps so both v7x TensorCores get work (v5e/v6e: 1 TC, unaffected).
    if n_batch * (hw_pad // t_hw) < 2 and t_hw % 256 == 0:
        t_hw //= 2
    return t_hw, hw_pad


def cpam_dec(x, y, wq, bq, wk, bk, wv, bv, scale, *,
             hw_tile_target=1024, io_dtype=jnp.bfloat16, mxu_dtype=jnp.bfloat16):
    """x: (N, C, W, H) f32; y: (N, K, M) with M == C; returns (N, C, W, H) in io_dtype."""
    N, C, W, H = x.shape
    _, K, M = y.shape
    assert M == C, "y's last dim must equal in_channels"
    C4 = wq.shape[0]
    HW = W * H

    t_hw, hw_pad = _choose_hw_tiling(HW, N, hw_tile_target)
    n_t = hw_pad // t_hw

    # Channels-first, spatially-flattened x: pure reshape (no HBM transpose).
    x_cm = x.reshape(N, C, HW).astype(io_dtype)
    if hw_pad != HW:
        x_cm = jnp.pad(x_cm, ((0, 0), (0, 0), (0, hw_pad - HW)))

    # proj_key / proj_value depend only on y: hoisted out of the kernel.
    K_pad = ((K + 7) // 8) * 8
    k_pre = jnp.einsum('nkm,om->nko', y, wk) + bk                  # (N, K, C/4)
    v_pre = jnp.einsum('om,nkm->nok', wv, y) + bv[None, :, None]   # (N, C, K)
    if K_pad != K:
        k_pre = jnp.pad(k_pre, ((0, 0), (0, K_pad - K), (0, 0)))
        v_pre = jnp.pad(v_pre, ((0, 0), (0, 0), (0, K_pad - K)))
    k_pre = k_pre.astype(mxu_dtype)
    v_pre = v_pre.astype(mxu_dtype)
    wq_m = wq.astype(mxu_dtype)

    bq2 = bq.reshape(C4, 1).astype(jnp.float32)                    # broadcasts over lanes (HW)
    mask = jnp.where(jnp.arange(K_pad) < K, 0.0, -1e30)
    mask = mask.astype(jnp.float32).reshape(K_pad, 1)              # additive K-pad mask
    scale2 = scale.reshape(1, 1).astype(jnp.float32)

    io_bytes = jnp.dtype(io_dtype).itemsize
    mxu_bytes = jnp.dtype(mxu_dtype).itemsize

    # VMEM budget: double-buffered x/out tiles + resident weights/k/v + f32
    # intermediates, clamped so the scoped limit is valid on v5e/v6e (128 MiB
    # physical) and v7x (64 MiB physical).
    tile_bytes = C * t_hw * io_bytes
    resident = mxu_bytes * (C4 * C + K_pad * C4 + C * K_pad) + 4 * (C4 + K_pad + 1)
    interm = 4 * t_hw * (C4 + 3 * K_pad + 2 * C)
    vmem_limit = int(min(max(2 * (4 * tile_bytes + resident) + interm, 32 << 20), 64 << 20))

    # Advisory cost estimate (constant-index-map operands are DMA'd once).
    flops = int(2 * N * hw_pad * (C * C4 + K_pad * (C4 + C))
                + 6 * N * hw_pad * K_pad + 3 * N * hw_pad * C)
    bytes_accessed = int(io_bytes * 2 * N * C * hw_pad
                         + mxu_bytes * (C4 * C + N * K_pad * C4 + N * C * K_pad)
                         + 4 * (C4 + K_pad + 1))
    cost = pl.CostEstimate(flops=flops, transcendentals=int(N * hw_pad * K_pad),
                           bytes_accessed=bytes_accessed)

    out_cm = pl.pallas_call(
        cpam_dec_kernel,
        out_shape=jax.ShapeDtypeStruct((N, C, hw_pad), io_dtype),
        grid_spec=pltpu.PrefetchScalarGridSpec(
            num_scalar_prefetch=0,
            grid=(N, n_t),
            in_specs=[
                pl.BlockSpec((1, C, t_hw), lambda b, t: (b, 0, t)),     # x (channels-first)
                # Constant index maps -> blocks stay resident across the grid.
                # (pipeline_mode=pl.Buffered(1) would also single-buffer them;
                #  omitted to keep lowering portable across jax versions.)
                pl.BlockSpec((C4, C), lambda b, t: (0, 0)),             # Wq
                pl.BlockSpec((C4, 1), lambda b, t: (0, 0)),             # bq
                pl.BlockSpec((1, K_pad, C4), lambda b, t: (b, 0, 0)),   # proj_key (precomputed)
                pl.BlockSpec((1, C, K_pad), lambda b, t: (b, 0, 0)),    # proj_value (precomputed)
                pl.BlockSpec((K_pad, 1), lambda b, t: (0, 0)),          # K-pad additive mask
                pl.BlockSpec((1, 1), lambda b, t: (0, 0),
                             memory_space=pltpu.MemorySpace.SMEM),      # scale
            ],
            out_specs=pl.BlockSpec((1, C, t_hw), lambda b, t: (b, 0, t)),
        ),
        compiler_params=pltpu.CompilerParams(
            dimension_semantics=("parallel", "parallel"),
            vmem_limit_bytes=vmem_limit),
        cost_estimate=cost,
    )(x_cm, wq_m, bq2, k_pre, v_pre, mask, scale2)

    if hw_pad != HW:
        out_cm = out_cm[:, :, :HW]
    return out_cm.reshape(N, C, W, H)


def cpam_dec_ref(x, y, wq, bq, wk, bk, wv, bv, scale):
    """Pure-JAX reference mirroring the PyTorch forward exactly (f32)."""
    N, C, W, H = x.shape
    proj_query = (jnp.einsum('nchw,oc->nohw', x, wq) +
                  bq[None, :, None, None]).reshape(N, -1, W * H).transpose(0, 2, 1)
    proj_key = (y @ wk.T + bk).transpose(0, 2, 1)          # (N, C/4, K)
    energy = jnp.einsum('npc,nck->npk', proj_query, proj_key)
    attention = jax.nn.softmax(energy, axis=-1)
    proj_value = (y @ wv.T + bv).transpose(0, 2, 1)        # (N, C, K)
    out = jnp.einsum('nck,npk->ncp', proj_value, attention).reshape(N, C, W, H)
    return scale[0] * out + x


if __name__ == "__main__":
    N, C, W, H = 2, 16, 32, 32     # HW = 1024 (lane-dense tiles, 2 grid steps)
    K = 6                          # not a multiple of 8: exercises K padding + mask
    C4 = C // 4

    key = jax.random.PRNGKey(0)
    ks = jax.random.split(key, 8)
    x = jax.random.normal(ks[0], (N, C, W, H), dtype=jnp.float32)
    y = jax.random.normal(ks[1], (N, K, C), dtype=jnp.float32)

    # Parameter shapes from __init__ (1x1 conv weight squeezed to (out, in)).
    wq = 0.1 * jax.random.normal(ks[2], (C4, C), dtype=jnp.float32)
    bq = 0.1 * jax.random.normal(ks[3], (C4,), dtype=jnp.float32)
    wk = 0.1 * jax.random.normal(ks[4], (C4, C), dtype=jnp.float32)
    bk = 0.1 * jax.random.normal(ks[5], (C4,), dtype=jnp.float32)
    wv = 0.1 * jax.random.normal(ks[6], (C, C), dtype=jnp.float32)
    bv = 0.1 * jax.random.normal(ks[7], (C,), dtype=jnp.float32)
    # nn.Parameter(torch.zeros(1)) in __init__; nonzero here so the attention
    # path actually contributes to the output.
    scale = jnp.array([0.5], dtype=jnp.float32)

    ref = cpam_dec_ref(x, y, wq, bq, wk, bk, wv, bv, scale)

    # Default fast path: bf16 MXU operands + bf16 x/out at the HBM boundary.
    # Tolerance covers bf16 rounding of x/out (|x| up to ~4 -> ~1e-2 abs) plus
    # the approx EUP reciprocal in the softmax.
    out = jax.block_until_ready(cpam_dec(x, y, wq, bq, wk, bk, wv, bv, scale))
    assert out.shape == (N, C, W, H)
    assert jnp.allclose(out.astype(jnp.float32), ref, atol=5e-2, rtol=2e-2), \
        "bf16 kernel mismatch vs reference"

    # Full-f32 path (only the softmax reciprocal is approximate).
    out_f32 = jax.block_until_ready(
        cpam_dec(x, y, wq, bq, wk, bk, wv, bv, scale,
                 io_dtype=jnp.float32, mxu_dtype=jnp.float32))
    assert jnp.allclose(out_f32, ref, atol=1e-3, rtol=1e-3), \
        "f32 kernel mismatch vs reference"

    print("KERNEL_OK")
</pallas_src>

<mosaic_0001>
module attributes {stable_mosaic.version = 11 : i64} {
  func.func @cpam_dec_kernel(%arg0: i32, %arg1: i32, %arg2: memref<1x16x1024xbf16, #tpu.memory_space<vmem>>, %arg3: memref<4x16xbf16, #tpu.memory_space<vmem>>, %arg4: memref<4x1xf32, #tpu.memory_space<vmem>>, %arg5: memref<1x8x4xbf16, #tpu.memory_space<vmem>>, %arg6: memref<1x16x8xbf16, #tpu.memory_space<vmem>>, %arg7: memref<8x1xf32, #tpu.memory_space<vmem>>, %arg8: memref<1x1xf32, #tpu.memory_space<smem>>, %arg9: memref<1x16x1024xbf16, #tpu.memory_space<vmem>>) attributes {dimension_semantics = [#tpu.dimension_semantics<parallel>, #tpu.dimension_semantics<parallel>], iteration_bounds = array<i64: 2, 1>, scalar_prefetch = 0 : i64, scratch_operands = 0 : i64, tpu.core_type = #tpu.core_type<tc>, window_params = [{transform_indices = @transform_0, window_bounds = array<i64: 1, 16, 1024>}, {pipeline_mode = #tpu.pipeline_mode<synchronous>, transform_indices = @transform_1, window_bounds = array<i64: 4, 16>}, {pipeline_mode = #tpu.pipeline_mode<synchronous>, transform_indices = @transform_2, window_bounds = array<i64: 4, 1>}, {transform_indices = @transform_3, window_bounds = array<i64: 1, 8, 4>}, {transform_indices = @transform_4, window_bounds = array<i64: 1, 16, 8>}, {pipeline_mode = #tpu.pipeline_mode<synchronous>, transform_indices = @transform_5, window_bounds = array<i64: 8, 1>}, {transform_indices = @transform_6, window_bounds = array<i64: 1, 1>}, {transform_indices = @transform_7, window_bounds = array<i64: 1, 16, 1024>}]} {
    %c0 = arith.constant 0 : index
    %c0_0 = arith.constant 0 : index
    %c0_1 = arith.constant 0 : index
    %0 = vector.load %arg2[%c0, %c0_0, %c0_1] : memref<1x16x1024xbf16, #tpu.memory_space<vmem>>, vector<1x16x1024xbf16>
    %1 = vector.shape_cast %0 : vector<1x16x1024xbf16> to vector<16x1024xbf16>
    %c0_2 = arith.constant 0 : index
    %c0_3 = arith.constant 0 : index
    %2 = vector.load %arg3[%c0_2, %c0_3] : memref<4x16xbf16, #tpu.memory_space<vmem>>, vector<4x16xbf16>
    %c0_4 = arith.constant 0 : index
    %c0_5 = arith.constant 0 : index
    %c0_6 = arith.constant 0 : index
    %3 = vector.load %arg5[%c0_4, %c0_5, %c0_6] : memref<1x8x4xbf16, #tpu.memory_space<vmem>>, vector<1x8x4xbf16>
    %4 = vector.shape_cast %3 : vector<1x8x4xbf16> to vector<8x4xbf16>
    %c0_7 = arith.constant 0 : index
    %c0_8 = arith.constant 0 : index
    %c0_9 = arith.constant 0 : index
    %5 = vector.load %arg6[%c0_7, %c0_8, %c0_9] : memref<1x16x8xbf16, #tpu.memory_space<vmem>>, vector<1x16x8xbf16>
    %6 = vector.shape_cast %5 : vector<1x16x8xbf16> to vector<16x8xbf16>
    %cst = arith.constant dense<0.000000e+00> : vector<4x1024xf32>
    %7 = tpu.matmul %2, %1, %cst {dimension_numbers = #tpu.dot_dimension_numbers<[1], [0], [0], [1], [0, 0, 1, 1], [], []>} : vector<4x16xbf16>, vector<16x1024xbf16>, vector<4x1024xf32> -> vector<4x1024xf32>
    %c0_10 = arith.constant 0 : index
    %c0_11 = arith.constant 0 : index
    %8 = vector.load %arg4[%c0_10, %c0_11] : memref<4x1xf32, #tpu.memory_space<vmem>>, vector<4x1xf32>
    %9 = vector.broadcast %8 : vector<4x1xf32> to vector<4x1024xf32>
    %10 = arith.addf %7, %9 : vector<4x1024xf32>
    %11 = arith.truncf %10 : vector<4x1024xf32> to vector<4x1024xbf16>
    %cst_12 = arith.constant dense<0.000000e+00> : vector<8x1024xf32>
    %12 = tpu.matmul %4, %11, %cst_12 {dimension_numbers = #tpu.dot_dimension_numbers<[1], [0], [0], [1], [0, 0, 1, 1], [], []>} : vector<8x4xbf16>, vector<4x1024xbf16>, vector<8x1024xf32> -> vector<8x1024xf32>
    %c0_13 = arith.constant 0 : index
    %c0_14 = arith.constant 0 : index
    %13 = vector.load %arg7[%c0_13, %c0_14] : memref<8x1xf32, #tpu.memory_space<vmem>>, vector<8x1xf32>
    %14 = vector.broadcast %13 : vector<8x1xf32> to vector<8x1024xf32>
    %15 = arith.addf %12, %14 : vector<8x1024xf32>
    %cst_15 = arith.constant dense<0xFF800000> : vector<1024xf32>
    %16 = vector.multi_reduction <maximumf>, %15, %cst_15 [0] : vector<8x1024xf32> to vector<1024xf32>
    %17 = vector.shape_cast %16 : vector<1024xf32> to vector<1x1024xf32>
    %18 = vector.broadcast %17 : vector<1x1024xf32> to vector<8x1024xf32>
    %19 = arith.subf %15, %18 : vector<8x1024xf32>
    %20 = math.exp %19 : vector<8x1024xf32>
    %cst_16 = arith.constant dense<0.000000e+00> : vector<1024xf32>
    %21 = vector.multi_reduction <add>, %20, %cst_16 [0] : vector<8x1024xf32> to vector<1024xf32>
    %22 = vector.shape_cast %21 : vector<1024xf32> to vector<1x1024xf32>
    %23 = tpu.reciprocal %22 {approx = true} : vector<1x1024xf32> -> vector<1x1024xf32>
    %24 = vector.broadcast %23 : vector<1x1024xf32> to vector<8x1024xf32>
    %25 = arith.mulf %20, %24 : vector<8x1024xf32>
    %26 = arith.truncf %25 : vector<8x1024xf32> to vector<8x1024xbf16>
    %cst_17 = arith.constant dense<0.000000e+00> : vector<16x1024xf32>
    %27 = tpu.matmul %6, %26, %cst_17 {dimension_numbers = #tpu.dot_dimension_numbers<[1], [0], [0], [1], [0, 0, 1, 1], [], []>} : vector<16x8xbf16>, vector<8x1024xbf16>, vector<16x1024xf32> -> vector<16x1024xf32>
    %c0_18 = arith.constant 0 : index
    %c0_19 = arith.constant 0 : index
    %28 = memref.load %arg8[%c0_18, %c0_19] : memref<1x1xf32, #tpu.memory_space<smem>>
    %29 = vector.broadcast %28 : f32 to vector<16x1024xf32>
    %30 = arith.mulf %29, %27 : vector<16x1024xf32>
    %31 = arith.extf %1 : vector<16x1024xbf16> to vector<16x1024xf32>
    %32 = arith.addf %30, %31 : vector<16x1024xf32>
    %33 = arith.truncf %32 : vector<16x1024xf32> to vector<16x1024xbf16>
    %c0_20 = arith.constant 0 : index
    %c0_21 = arith.constant 0 : index
    %c0_22 = arith.constant 0 : index
    %34 = vector.load %arg9[%c0_20, %c0_21, %c0_22] : memref<1x16x1024xbf16, #tpu.memory_space<vmem>>, vector<1x16x1024xbf16>
    %35 = vector.shape_cast %34 : vector<1x16x1024xbf16> to vector<16x1024xbf16>
    %36 = vector.shape_cast %33 : vector<16x1024xbf16> to vector<1x16x1024xbf16>
    tpu.vector_store %arg9[%c0_20, %c0_21, %c0_22], %36 {strides = array<i32>} : memref<1x16x1024xbf16, #tpu.memory_space<vmem>>, vector<1x16x1024xbf16>,
    return
  }
  func.func @transform_0(%arg0: i32, %arg1: i32) -> (i32, i32, i32) {
    %c0_i32 = arith.constant 0 : i32
    %c0_i32_0 = arith.constant 0 : i32
    return %arg0, %c0_i32, %arg1 : i32, i32, i32
  }
  func.func @transform_1(%arg0: i32, %arg1: i32) -> (i32, i32) {
    %c0_i32 = arith.constant 0 : i32
    %c0_i32_0 = arith.constant 0 : i32
    %c0_i32_1 = arith.constant 0 : i32
    return %c0_i32, %c0_i32_0 : i32, i32
  }
  func.func @transform_2(%arg0: i32, %arg1: i32) -> (i32, i32) {
    %c0_i32 = arith.constant 0 : i32
    %c0_i32_0 = arith.constant 0 : i32
    %c0_i32_1 = arith.constant 0 : i32
    return %c0_i32, %c0_i32_0 : i32, i32
  }
  func.func @transform_3(%arg0: i32, %arg1: i32) -> (i32, i32, i32) {
    %c0_i32 = arith.constant 0 : i32
    %c0_i32_0 = arith.constant 0 : i32
    %c0_i32_1 = arith.constant 0 : i32
    return %arg0, %c0_i32, %c0_i32_0 : i32, i32, i32
  }
  func.func @transform_4(%arg0: i32, %arg1: i32) -> (i32, i32, i32) {
    %c0_i32 = arith.constant 0 : i32
    %c0_i32_0 = arith.constant 0 : i32
    %c0_i32_1 = arith.constant 0 : i32
    return %arg0, %c0_i32, %c0_i32_0 : i32, i32, i32
  }
  func.func @transform_5(%arg0: i32, %arg1: i32) -> (i32, i32) {
    %c0_i32 = arith.constant 0 : i32
    %c0_i32_0 = arith.constant 0 : i32
    %c0_i32_1 = arith.constant 0 : i32
    return %c0_i32, %c0_i32_0 : i32, i32
  }
  func.func @transform_6(%arg0: i32, %arg1: i32) -> (i32, i32) {
    %c0_i32 = arith.constant 0 : i32
    %c0_i32_0 = arith.constant 0 : i32
    %c0_i32_1 = arith.constant 0 : i32
    return %c0_i32, %c0_i32_0 : i32, i32
  }
  func.func @transform_7(%arg0: i32, %arg1: i32) -> (i32, i32, i32) {
    %c0_i32 = arith.constant 0 : i32
    %c0_i32_0 = arith.constant 0 : i32
    return %arg0, %c0_i32, %arg1 : i32, i32, i32
  }
}

</mosaic_0001>

<llo_original>
// kernel: tpu_custom_call.1
$region0: #{tpu_custom_call.1}
  #allocation0 [shape = 'u32[]', space=smem, size = 0x4, offset = 0x4, fixed_abs, tag = 'smem constant byte address 0x4 - core index']
  #allocation1 [shape = 'u32[144,128]{1,0:T(1,128)}', space=vmem, size = 0x12000, scoped, tag = 'internal scratch']
  #allocation2 [shape = 'f32[1,1]{1,0:T(1,128)S(6)}', space=smem, size = 0x200, scoped, tag = 'scoped memory for tpu_custom_call.1']
  %s0 = inlined_call_operand.hbm [shape: bf16[2,16,1024], index: 0, kind: input, shape index: {}]
  %s1 = inlined_call_operand.vmem [shape: bf16[4,16], index: 1, kind: input, shape index: {}]
  %s2 = inlined_call_operand.vmem [shape: f32[4,1], index: 2, kind: input, shape index: {}]
  %s3 = inlined_call_operand.vmem [shape: bf16[2,8,4], index: 3, kind: input, shape index: {}]
  %s4 = inlined_call_operand.vmem [shape: bf16[2,16,8], index: 4, kind: input, shape index: {}]
  %s5 = inlined_call_operand.vmem [shape: f32[8,1], index: 5, kind: input, shape index: {}]
  %s6 = inlined_call_operand.<no memory space> [shape: f32[1,1], index: 6, kind: input, shape index: {}]
  %s7 = inlined_call_operand.hbm [shape: bf16[2,16,1024], index: 7, kind: output, shape index: {}]
  %s8 = sld [smem:[#allocation0]]
  $region65: #{tpu_custom_call.1} parent=0
    _
  %s10 = ssub.s32 1, %s8
  %s11 = scalar_select 0, %s10, %s8
  %12 = sst [smem:[#allocation2]] %s6
  $region1: #{tpu_custom_call.1} parent=0
    #allocation3 [shape = 'u8[65536]{0}', space=vmem, size = 0x10000, scoped, tag = 'input window, operand 0']
    #allocation4 [shape = 's32[2]{0}', space=sflag, size = 0x8, scoped, tag = 'scoped memory for tpu_custom_call.1']
    #allocation5 [shape = 's32[2]{0}', space=sflag, size = 0x8, scoped, tag = 'scoped memory for tpu_custom_call.1']
    #allocation6 [shape = 'u8[65536]{0}', space=vmem, size = 0x10000, scoped, tag = 'output window, operand 0']
    %13 = vsyncpa [#allocation4], 0
    %s14 = scalar_lea.sflag [#allocation4], 1
    %15 = vsyncpa %s14, 0
    %16 = vsyncpa [#allocation5], 0
    %s17 = scalar_lea.sflag [#allocation5], 1
    %18 = vsyncpa %s17, 0
    loop: start=0, step=1, limit=4
    $region2: #{tpu_custom_call.1} parent=1 // loop_pre_header
      _
    $region3: #{tpu_custom_call.1} parent=1 // loop_header
      %s20 = sphi 0, %s24
      %p21 = scmp.ge.s32.totalorder %s20, 4
      %s27 = sphi 0, %s39
      %s28 = sphi 0, %s35
      %s29 = sphi 0, %s27
      %s30 = sphi 0, %s28
      %s31 = sphi 0, %s29
      %s32 = sphi 0, %s30
      %s44 = sphi 0, %s46
      %s47 = sphi 0, %s44
      %s48 = sphi 0, %s47
      %s64 = sphi 0, %s48
      %s68 = sphi 0, %s68
      %s70 = sphi 0, %s68
      %s71 = sphi 0, %s70
      %s85 = sphi 0, %s71
      %s89 = sphi 0, %s89
      %s91 = sphi 0, %s89
      %s92 = sphi 0, %s91
      %s106 = sphi 0, %s92
      %s112 = sphi 0, %s114
      %s115 = sphi 0, %s112
      %s116 = sphi 0, %s115
      %s132 = sphi 0, %s116
      %s138 = sphi 0, %s140
      %s141 = sphi 0, %s138
      %s142 = sphi 0, %s141
      %s158 = sphi 0, %s142
      %s162 = sphi 0, %s162
      %s164 = sphi 0, %s162
      %s165 = sphi 0, %s164
      %s179 = sphi 0, %s165
      %s183 = sphi 0, %s183
      %s185 = sphi 0, %s183
      %s186 = sphi 0, %s185
      %s200 = sphi 0, %s186
      %s208 = sphi 0, %s210
      %s211 = sphi 0, %s208
      %s212 = sphi 0, %s211
      %s228 = sphi 0, %s212
    $region4: #{tpu_custom_call.1} parent=1 // loop_header_branch
      %23 = sbr.rel (%p21) target = $region8
    $region5: #{tpu_custom_call.1} parent=1 // loop_body
      %s25 = ssub.s32 %s20, 1
      %s26 = ssub.s32 %s20, 2
      %s33 = sadd.s32 1, %s28
      %p34 = scmp.ge.s32.totalorder %s33, 1
      %s35 = scalar_select %p34, 0, %s33
      %s36 = sadd.s32 1, %s27
      %s37 = scalar_select %p34, %s36, %s27
      %p38 = scmp.ge.s32.totalorder %s37, 2
      %s39 = scalar_select %p38, 0, %s37
      %s40 = ssub.s32 %s27, %s39
      %s41 = ssub.s32 %s28, %s35
      %s42 = sor.u32 %s40, %s41
      %p43 = scmp.eq.s32.totalorder %s42, 0
      %s45 = sadd.s32 %s44, 1
      %s46 = scalar_select %p43, %s44, %s45
      %p49 = pneg %p43
      %p50 = scmp.eq.s32.totalorder %s20, 1
      %p51 = por %p49, %p50
      %p52 = scmp.ne.s32.totalorder %s44, %s47
      %p53 = scmp.eq.s32.totalorder %s20, 0
      %p54 = por %p52, %p53
      %p55 = scmp.ne.s32.totalorder %s44, %s47
      %p56 = scmp.eq.s32.totalorder %s25, 1
      %p57 = por %p55, %p56
      %p58 = scmp.ne.s32.totalorder %s47, %s48
      %p59 = scmp.eq.s32.totalorder %s25, 0
      %p60 = por %p58, %p59
      %p61 = scmp.ne.s32.totalorder %s47, %s48
      %p62 = scmp.eq.s32.totalorder %s26, 1
      %p63 = por %p61, %p62
      %p65 = scmp.ne.s32.totalorder %s48, %s64
      %p66 = scmp.eq.s32.totalorder %s26, 0
      %p67 = por %p65, %p66
      %s69 = sadd.s32 %s68, 1
      %p72 = scmp.eq.s32.totalorder %s20, 1
      %p73 = scmp.ne.s32.totalorder %s68, %s70
      %p74 = scmp.eq.s32.totalorder %s20, 0
      %p75 = por %p73, %p74
      %p76 = scmp.ne.s32.totalorder %s68, %s70
      %p77 = scmp.eq.s32.totalorder %s25, 1
      %p78 = por %p76, %p77
      %p79 = scmp.ne.s32.totalorder %s70, %s71
      %p80 = scmp.eq.s32.totalorder %s25, 0
      %p81 = por %p79, %p80
      %p82 = scmp.ne.s32.totalorder %s70, %s71
      %p83 = scmp.eq.s32.totalorder %s26, 1
      %p84 = por %p82, %p83
      %p86 = scmp.ne.s32.totalorder %s71, %s85
      %p87 = scmp.eq.s32.totalorder %s26, 0
      %p88 = por %p86, %p87
      %s90 = sadd.s32 %s89, 1
      %p93 = scmp.eq.s32.totalorder %s20, 1
      %p94 = scmp.ne.s32.totalorder %s89, %s91
      %p95 = scmp.eq.s32.totalorder %s20, 0
      %p96 = por %p94, %p95
      %p97 = scmp.ne.s32.totalorder %s89, %s91
      %p98 = scmp.eq.s32.totalorder %s25, 1
      %p99 = por %p97, %p98
      %p100 = scmp.ne.s32.totalorder %s91, %s92
      %p101 = scmp.eq.s32.totalorder %s25, 0
      %p102 = por %p100, %p101
      %p103 = scmp.ne.s32.totalorder %s91, %s92
      %p104 = scmp.eq.s32.totalorder %s26, 1
      %p105 = por %p103, %p104
      %p107 = scmp.ne.s32.totalorder %s92, %s106
      %p108 = scmp.eq.s32.totalorder %s26, 0
      %p109 = por %p107, %p108
      %s110 = ssub.s32 %s27, %s39
      %p111 = scmp.eq.s32.totalorder %s110, 0
      %s113 = sadd.s32 %s112, 1
      %s114 = scalar_select %p111, %s112, %s113
      %p117 = pneg %p111
      %p118 = scmp.eq.s32.totalorder %s20, 1
      %p119 = por %p117, %p118
      %p120 = scmp.ne.s32.totalorder %s112, %s115
      %p121 = scmp.eq.s32.totalorder %s20, 0
      %p122 = por %p120, %p121
      %p123 = scmp.ne.s32.totalorder %s112, %s115
      %p124 = scmp.eq.s32.totalorder %s25, 1
      %p125 = por %p123, %p124
      %p126 = scmp.ne.s32.totalorder %s115, %s116
      %p127 = scmp.eq.s32.totalorder %s25, 0
      %p128 = por %p126, %p127
      %p129 = scmp.ne.s32.totalorder %s115, %s116
      %p130 = scmp.eq.s32.totalorder %s26, 1
      %p131 = por %p129, %p130
      %p133 = scmp.ne.s32.totalorder %s116, %s132
      %p134 = scmp.eq.s32.totalorder %s26, 0
      %p135 = por %p133, %p134
      %s136 = ssub.s32 %s27, %s39
      %p137 = scmp.eq.s32.totalorder %s136, 0
      %s139 = sadd.s32 %s138, 1
      %s140 = scalar_select %p137, %s138, %s139
      %p143 = pneg %p137
      %p144 = scmp.eq.s32.totalorder %s20, 1
      %p145 = por %p143, %p144
      %p146 = scmp.ne.s32.totalorder %s138, %s141
      %p147 = scmp.eq.s32.totalorder %s20, 0
      %p148 = por %p146, %p147
      %p149 = scmp.ne.s32.totalorder %s138, %s141
      %p150 = scmp.eq.s32.totalorder %s25, 1
      %p151 = por %p149, %p150
      %p152 = scmp.ne.s32.totalorder %s141, %s142
      %p153 = scmp.eq.s32.totalorder %s25, 0
      %p154 = por %p152, %p153
      %p155 = scmp.ne.s32.totalorder %s141, %s142
      %p156 = scmp.eq.s32.totalorder %s26, 1
      %p157 = por %p155, %p156
      %p159 = scmp.ne.s32.totalorder %s142, %s158
      %p160 = scmp.eq.s32.totalorder %s26, 0
      %p161 = por %p159, %p160
      %s163 = sadd.s32 %s162, 1
      %p166 = scmp.eq.s32.totalorder %s20, 1
      %p167 = scmp.ne.s32.totalorder %s162, %s164
      %p168 = scmp.eq.s32.totalorder %s20, 0
      %p169 = por %p167, %p168
      %p170 = scmp.ne.s32.totalorder %s162, %s164
      %p171 = scmp.eq.s32.totalorder %s25, 1
      %p172 = por %p170, %p171
      %p173 = scmp.ne.s32.totalorder %s164, %s165
      %p174 = scmp.eq.s32.totalorder %s25, 0
      %p175 = por %p173, %p174
      %p176 = scmp.ne.s32.totalorder %s164, %s165
      %p177 = scmp.eq.s32.totalorder %s26, 1
      %p178 = por %p176, %p177
      %p180 = scmp.ne.s32.totalorder %s165, %s179
      %p181 = scmp.eq.s32.totalorder %s26, 0
      %p182 = por %p180, %p181
      %s184 = sadd.s32 %s183, 1
      %p187 = scmp.eq.s32.totalorder %s20, 1
      %p188 = scmp.ne.s32.totalorder %s183, %s185
      %p189 = scmp.eq.s32.totalorder %s20, 0
      %p190 = por %p188, %p189
      %p191 = scmp.ne.s32.totalorder %s183, %s185
      %p192 = scmp.eq.s32.totalorder %s25, 1
      %p193 = por %p191, %p192
      %p194 = scmp.ne.s32.totalorder %s185, %s186
      %p195 = scmp.eq.s32.totalorder %s25, 0
      %p196 = por %p194, %p195
      %p197 = scmp.ne.s32.totalorder %s185, %s186
      %p198 = scmp.eq.s32.totalorder %s26, 1
      %p199 = por %p197, %p198
      %p201 = scmp.ne.s32.totalorder %s186, %s200
      %p202 = scmp.eq.s32.totalorder %s26, 0
      %p203 = por %p201, %p202
      %s204 = ssub.s32 %s27, %s39
      %s205 = ssub.s32 %s28, %s35
      %s206 = sor.u32 %s204, %s205
      %p207 = scmp.eq.s32.totalorder %s206, 0
      %s209 = sadd.s32 %s208, 1
      %s210 = scalar_select %p207, %s208, %s209
      %p213 = pneg %p207
      %p214 = scmp.eq.s32.totalorder %s20, 1
      %p215 = por %p213, %p214
      %p216 = scmp.ne.s32.totalorder %s208, %s211
      %p217 = scmp.eq.s32.totalorder %s20, 0
      %p218 = por %p216, %p217
      %p219 = scmp.ne.s32.totalorder %s208, %s211
      %p220 = scmp.eq.s32.totalorder %s25, 1
      %p221 = por %p219, %p220
      %p222 = scmp.ne.s32.totalorder %s211, %s212
      %p223 = scmp.eq.s32.totalorder %s25, 0
      %p224 = por %p222, %p223
      %p225 = scmp.ne.s32.totalorder %s211, %s212
      %p226 = scmp.eq.s32.totalorder %s26, 1
      %p227 = por %p225, %p226
      %p229 = scmp.ne.s32.totalorder %s212, %s228
      %p230 = scmp.eq.s32.totalorder %s26, 0
      %p231 = por %p229, %p230
      %p232 = scmp.le.s32.totalorder 1, %s20
      %p233 = scmp.lt.s32.totalorder %s20, 3
      %p234 = pnand %p232, %p233
      %p235 = pneg %p234
      // Predicated region
      $region9: #{tpu_custom_call.1} parent=5 // pred_check
        _
      $region10: #{tpu_custom_call.1} parent=5 // pred_check_branch
        %237 = sbr.rel (%p234) target = $region12
      $region11: #{tpu_custom_call.1} parent=5 // pred_region
        %s238 = ssub.s32 %s20, 1
        // Predicated region
        $region13: #{tpu_custom_call.1} parent=11 // pred_check
          %p239 = pneg %p81
        $region14: #{tpu_custom_call.1} parent=11 // pred_check_branch
          %241 = sbr.rel (%p239) target = $region16
        $region15: #{tpu_custom_call.1} parent=11 // pred_region
          _
        $region16: #{tpu_custom_call.1} parent=11 // pred_fallthru
          _
        // Predicated region
        $region17: #{tpu_custom_call.1} parent=11 // pred_check
          %p242 = pneg %p102
        $region18: #{tpu_custom_call.1} parent=11 // pred_check_branch
          %244 = sbr.rel (%p242) target = $region20
        $region19: #{tpu_custom_call.1} parent=11 // pred_region
          _
        $region20: #{tpu_custom_call.1} parent=11 // pred_fallthru
          _
        // Predicated region
        $region21: #{tpu_custom_call.1} parent=11 // pred_check
          %p245 = pneg %p175
        $region22: #{tpu_custom_call.1} parent=11 // pred_check_branch
          %247 = sbr.rel (%p245) target = $region24
        $region23: #{tpu_custom_call.1} parent=11 // pred_region
          _
        $region24: #{tpu_custom_call.1} parent=11 // pred_fallthru
          _
        // Predicated region
        $region25: #{tpu_custom_call.1} parent=11 // pred_check
          %p248 = pneg %p196
        $region26: #{tpu_custom_call.1} parent=11 // pred_check_branch
          %250 = sbr.rel (%p248) target = $region28
        $region27: #{tpu_custom_call.1} parent=11 // pred_region
          _
        $region28: #{tpu_custom_call.1} parent=11 // pred_fallthru
          _
      $region12: #{tpu_custom_call.1} parent=5 // pred_fallthru
        _
      %p251 = scmp.lt.s32.totalorder %s20, 2
      // Predicated region
      $region29: #{tpu_custom_call.1} parent=5 // pred_check
        %p252 = pneg %p251
      $region30: #{tpu_custom_call.1} parent=5 // pred_check_branch
        %254 = sbr.rel (%p252) target = $region32
      $region31: #{tpu_custom_call.1} parent=5 // pred_region
        // Predicated region
        $region33: #{tpu_custom_call.1} parent=31 // pred_check
          %p255 = pneg %p54
        $region34: #{tpu_custom_call.1} parent=31 // pred_check_branch
          %257 = sbr.rel (%p255) target = $region36
        $region35: #{tpu_custom_call.1} parent=31 // pred_region
          %s258 = sand.u32 %s44, 1
          %s259 = scalar_lea.sflag [#allocation4], %s258
          %s260 = sand.u32 %s44, 1
          %s261 = smul.addr %s260, 64
          %s262 = scalar_lea.vmem [#allocation3], %s261
          %s263 = smul.u32 8, %s28
          %s265 = ssub.s32 1024, 1024
          %266 = vsyncadd %s259, %s265
          %s267 = smul.addr %s27, 16
          %s268 = sadd.s32 %s263, %s267
          %s269 = smul.addr %s268, 64
          %s270 = scalar_lea.hbm %s0, %s269
          %s271 = sshll.u32 %s262, 4
          %s272 = int_to_ptr.vmem [resolvable:$true] %s271
          %277 = dma.hbm_to_vmem [thread:$0]  %s270, 1024, %s272, %s259, 512, 512, 32
        $region36: #{tpu_custom_call.1} parent=31 // pred_fallthru
          _
        // Predicated region
        $region37: #{tpu_custom_call.1} parent=31 // pred_check
          %p278 = pneg %p122
        $region38: #{tpu_custom_call.1} parent=31 // pred_check_branch
          %280 = sbr.rel (%p278) target = $region40
        $region39: #{tpu_custom_call.1} parent=31 // pred_region
          %p281 = scmp.lt.s32.totalorder %s27, 1
          %s282 = scalar_select %p281, %s27, 1
          %s283 = smul.addr %s282, 4
          %s284 = scalar_lea.vmem %s3, %s283
        $region40: #{tpu_custom_call.1} parent=31 // pred_fallthru
          _
        // Predicated region
        $region41: #{tpu_custom_call.1} parent=31 // pred_check
          %p285 = pneg %p148
        $region42: #{tpu_custom_call.1} parent=31 // pred_check_branch
          %287 = sbr.rel (%p285) target = $region44
        $region43: #{tpu_custom_call.1} parent=31 // pred_region
          %p288 = scmp.lt.s32.totalorder %s27, 1
          %s289 = scalar_select %p288, %s27, 1
          %s290 = smul.addr %s289, 2
          %s291 = smul.addr %s290, 4
          %s292 = scalar_lea.vmem %s4, %s291
        $region44: #{tpu_custom_call.1} parent=31 // pred_fallthru
          _
      $region32: #{tpu_custom_call.1} parent=5 // pred_fallthru
        _
      %p293 = scmp.le.s32.totalorder 1, %s20
      %p294 = scmp.lt.s32.totalorder %s20, 3
      %p295 = pnand %p293, %p294
      %p296 = pneg %p295
      // Predicated region
      $region45: #{tpu_custom_call.1} parent=5 // pred_check
        _
      $region46: #{tpu_custom_call.1} parent=5 // pred_check_branch
        %298 = sbr.rel (%p295) target = $region48
      $region47: #{tpu_custom_call.1} parent=5 // pred_region
        %s299 = ssub.s32 %s20, 1
        %s300 = sand.u32 %s47, 1
        %s301 = scalar_lea.sflag [#allocation4], %s300
        %s302 = sand.u32 %s47, 1
        %s303 = smul.addr %s302, 64
        %s304 = scalar_lea.vmem [#allocation3], %s303
        // Predicated region
        $region49: #{tpu_custom_call.1} parent=47 // pred_check
          %p305 = pneg %p60
        $region50: #{tpu_custom_call.1} parent=47 // pred_check_branch
          %307 = sbr.rel (%p305) target = $region52
        $region51: #{tpu_custom_call.1} parent=47 // pred_region
          %308 = dma.done %s301, 1024
        $region52: #{tpu_custom_call.1} parent=47 // pred_fallthru
          _
        %s309 = sand.u32 %s47, 1
        %s310 = scalar_lea.sflag [#allocation4], %s309
        %s311 = sand.u32 %s47, 1
        %s312 = smul.addr %s311, 64
        %s313 = scalar_lea.vmem [#allocation3], %s312
        %p314 = pneg %p60
        %p315 = pneg %p57
        %p316 = pneg %p81
        %p317 = pneg %p78
        %p318 = pneg %p102
        %p319 = pneg %p99
        %p320 = scmp.lt.s32.totalorder %s29, 1
        %s321 = scalar_select %p320, %s29, 1
        %s322 = smul.addr %s321, 4
        %s323 = scalar_lea.vmem %s3, %s322
        %p324 = pneg %p128
        %p325 = pneg %p125
        %p326 = scmp.lt.s32.totalorder %s29, 1
        %s327 = scalar_select %p326, %s29, 1
        %s328 = smul.addr %s327, 2
        %s329 = smul.addr %s328, 4
        %s330 = scalar_lea.vmem %s4, %s329
        %p331 = pneg %p154
        %p332 = pneg %p151
        %p333 = pneg %p175
        %p334 = pneg %p172
        %p335 = pneg %p196
        %p336 = pneg %p193
        %p337 = pneg %p224
        %p338 = pneg %p221
        %s339 = sand.u32 %s211, 1
        %s340 = scalar_lea.sflag [#allocation5], %s339
        %s341 = sand.u32 %s211, 1
        %s342 = smul.addr %s341, 64
        %s343 = scalar_lea.vmem [#allocation6], %s342
        %s344 = smul.u32 8, %s30
        %p345 = scmp.lt.s32.totalorder %s29, 1
        %s346 = scalar_select %p345, %s29, 1
        %s347 = smul.addr %s346, 4
        %s348 = scalar_lea.vmem %s3, %s347
        %p349 = scmp.lt.s32.totalorder %s29, 1
        %s350 = scalar_select %p349, %s29, 1
        %s351 = smul.addr %s350, 2
        %s352 = smul.addr %s351, 4
        %s353 = scalar_lea.vmem %s4, %s352
        %s354 = smul.u32 8, %s30
        %v356 = vld [vmem:[%s304] sm:$0xff]
        %v357 = vld [vmem:[%s304 + $0x8] sm:$0xff]
        %v358 = vld [vmem:[%s304 + $0x10] sm:$0xff]
        %v359 = vld [vmem:[%s304 + $0x18] sm:$0xff]
        %v360 = vld [vmem:[%s304 + $0x20] sm:$0xff]
        %v361 = vld [vmem:[%s304 + $0x28] sm:$0xff]
        %v362 = vld [vmem:[%s304 + $0x30] sm:$0xff]
        %v363 = vld [vmem:[%s304 + $0x38] sm:$0xff]
        %v364 = vld [vmem:[%s1] sm:$0x3]
        %v365 = vld [vmem:[%s348] sm:$0xf]
        %v366 = vld [vmem:[%s353] sm:$0xf]
        %v367 = vld [vmem:[%s353 + $0x4] sm:$0xf]
        %v368 = vld [vmem:[%s2] sm:$0xf]
        %370 = vset.pattern.permute.xlu0 0
        %371 = vperm.xlu0 %370, %v368
        %v372 = vpop.permute.xlu0 %371
        %v382 = vunpack.c.l.b16 %v356
        %v383 = vunpack.c.h.b16 %v356
        %v384 = vunpack.c.l.b16 %v357
        %v385 = vunpack.c.h.b16 %v357
        %v386 = vunpack.c.l.b16 %v358
        %v387 = vunpack.c.h.b16 %v358
        %v388 = vunpack.c.l.b16 %v359
        %v389 = vunpack.c.h.b16 %v359
        %v390 = vunpack.c.l.b16 %v360
        %v391 = vunpack.c.h.b16 %v360
        %v392 = vunpack.c.l.b16 %v361
        %v393 = vunpack.c.h.b16 %v361
        %v394 = vunpack.c.l.b16 %v362
        %v395 = vunpack.c.h.b16 %v362
        %v396 = vunpack.c.l.b16 %v363
        %v397 = vunpack.c.h.b16 %v363
        %v398 = vpack.c.b16 %v390, %v382
        %v399 = vpack.c.b16 %v391, %v383
        %v400 = vpack.c.b16 %v392, %v384
        %v401 = vpack.c.b16 %v393, %v385
        %v402 = vpack.c.b16 %v394, %v386
        %v403 = vpack.c.b16 %v395, %v387
        %v404 = vpack.c.b16 %v396, %v388
        %v405 = vpack.c.b16 %v397, %v389
        %vm414 = vcmask 130048
        %v416 = vsel %vm414, %v364, 0
        %418 = vmatprep.subr.bf16.mxu0 %v399
        %419 = vmatpush1.bf16.msra.mxu0 %v398
        %420 = vmatprep.subr.bf16.mxu0 0
        %421 = vmatpush1.bf16.msra.mxu0 0
        %422 = vmatprep.subr.bf16.mxu0 0
        %423 = vmatpush1.bf16.msra.mxu0 0
        %424 = vmatprep.subr.bf16.mxu0 0
        %425 = vmatpush1.bf16.msra.mxu0 0
        %426 = vmatprep.subr.bf16.mxu0 0
        %427 = vmatpush1.bf16.msra.mxu0 0
        %428 = vmatprep.subr.bf16.mxu0 0
        %429 = vmatpush1.bf16.msra.mxu0 0
        %430 = vmatprep.subr.bf16.mxu0 0
        %431 = vmatpush1.bf16.msra.mxu0 0
        %432 = vmatprep.subr.bf16.mxu0 0
        %433 = vmatpush1.bf16.msra.mxu0 0
        %434 = vmatprep.subr.bf16.mxu0 0
        %435 = vmatpush1.bf16.msra.mxu0 0
        %436 = vmatprep.subr.bf16.mxu0 0
        %437 = vmatpush1.bf16.msra.mxu0 0
        %438 = vmatprep.subr.bf16.mxu0 0
        %439 = vmatpush1.bf16.msra.mxu0 0
        %440 = vmatprep.subr.bf16.mxu0 0
        %441 = vmatpush1.bf16.msra.mxu0 0
        %442 = vmatprep.subr.bf16.mxu0 0
        %443 = vmatpush1.bf16.msra.mxu0 0
        %444 = vmatprep.subr.bf16.mxu0 0
        %445 = vmatpush1.bf16.msra.mxu0 0
        %446 = vmatprep.subr.bf16.mxu0 0
        %447 = vmatpush1.bf16.msra.mxu0 0
        %448 = vmatprep.subr.bf16.mxu0 0
        %449 = vmatpush1.bf16.msra.mxu0 0
        %450 = vmatprep.mubr.bf16.mxu0 0
        %451 = vmatmul.mubr.bf16.gmra.mrb[0].mxu0 %v416
        %v452 = vpop.f32.mrb[0].mxu0
        %v453 = vadd.f32 %v372, %v452
        %v454 = vpop.f32.mrb[0].mxu0
        %v455 = vadd.f32 %v372, %v454
        %v456 = vpop.f32.mrb[0].mxu0
        %v457 = vpop.f32.mrb[0].mxu0
        %458 = vdwg.mxu0
        %459 = vmatprep.subr.bf16.mxu0 %v401
        %460 = vmatpush1.bf16.msra.mxu0 %v400
        %461 = vmatprep.subr.bf16.mxu0 0
        %462 = vmatpush1.bf16.msra.mxu0 0
        %463 = vmatprep.subr.bf16.mxu0 0
        %464 = vmatpush1.bf16.msra.mxu0 0
        %465 = vmatprep.subr.bf16.mxu0 0
        %466 = vmatpush1.bf16.msra.mxu0 0
        %467 = vmatprep.subr.bf16.mxu0 0
        %468 = vmatpush1.bf16.msra.mxu0 0
        %469 = vmatprep.subr.bf16.mxu0 0
        %470 = vmatpush1.bf16.msra.mxu0 0
        %471 = vmatprep.subr.bf16.mxu0 0
        %472 = vmatpush1.bf16.msra.mxu0 0
        %473 = vmatprep.subr.bf16.mxu0 0
        %474 = vmatpush1.bf16.msra.mxu0 0
        %475 = vmatprep.subr.bf16.mxu0 0
        %476 = vmatpush1.bf16.msra.mxu0 0
        %477 = vmatprep.subr.bf16.mxu0 0
        %478 = vmatpush1.bf16.msra.mxu0 0
        %479 = vmatprep.subr.bf16.mxu0 0
        %480 = vmatpush1.bf16.msra.mxu0 0
        %481 = vmatprep.subr.bf16.mxu0 0
        %482 = vmatpush1.bf16.msra.mxu0 0
        %483 = vmatprep.subr.bf16.mxu0 0
        %484 = vmatpush1.bf16.msra.mxu0 0
        %485 = vmatprep.subr.bf16.mxu0 0
        %486 = vmatpush1.bf16.msra.mxu0 0
        %487 = vmatprep.subr.bf16.mxu0 0
        %488 = vmatpush1.bf16.msra.mxu0 0
        %489 = vmatprep.subr.bf16.mxu0 0
        %490 = vmatpush1.bf16.msra.mxu0 0
        %491 = vmatprep.mubr.bf16.mxu0 0
        %492 = vmatmul.mubr.bf16.gmra.mrb[0].mxu0 %v416
        %v493 = vpop.f32.mrb[0].mxu0
        %v494 = vadd.f32 %v372, %v493
        %v495 = vpop.f32.mrb[0].mxu0
        %v496 = vadd.f32 %v372, %v495
        %v497 = vpop.f32.mrb[0].mxu0
        %v498 = vpop.f32.mrb[0].mxu0
        %499 = vdwg.mxu0
        %500 = vmatprep.subr.bf16.mxu0 %v403
        %501 = vmatpush1.bf16.msra.mxu0 %v402
        %502 = vmatprep.subr.bf16.mxu0 0
        %503 = vmatpush1.bf16.msra.mxu0 0
        %504 = vmatprep.subr.bf16.mxu0 0
        %505 = vmatpush1.bf16.msra.mxu0 0
        %506 = vmatprep.subr.bf16.mxu0 0
        %507 = vmatpush1.bf16.msra.mxu0 0
        %508 = vmatprep.subr.bf16.mxu0 0
        %509 = vmatpush1.bf16.msra.mxu0 0
        %510 = vmatprep.subr.bf16.mxu0 0
        %511 = vmatpush1.bf16.msra.mxu0 0
        %512 = vmatprep.subr.bf16.mxu0 0
        %513 = vmatpush1.bf16.msra.mxu0 0
        %514 = vmatprep.subr.bf16.mxu0 0
        %515 = vmatpush1.bf16.msra.mxu0 0
        %516 = vmatprep.subr.bf16.mxu0 0
        %517 = vmatpush1.bf16.msra.mxu0 0
        %518 = vmatprep.subr.bf16.mxu0 0
        %519 = vmatpush1.bf16.msra.mxu0 0
        %520 = vmatprep.subr.bf16.mxu0 0
        %521 = vmatpush1.bf16.msra.mxu0 0
        %522 = vmatprep.subr.bf16.mxu0 0
        %523 = vmatpush1.bf16.msra.mxu0 0
        %524 = vmatprep.subr.bf16.mxu0 0
        %525 = vmatpush1.bf16.msra.mxu0 0
        %526 = vmatprep.subr.bf16.mxu0 0
        %527 = vmatpush1.bf16.msra.mxu0 0
        %528 = vmatprep.subr.bf16.mxu0 0
        %529 = vmatpush1.bf16.msra.mxu0 0
        %530 = vmatprep.subr.bf16.mxu0 0
        %531 = vmatpush1.bf16.msra.mxu0 0
        %532 = vmatprep.mubr.bf16.mxu0 0
        %533 = vmatmul.mubr.bf16.gmra.mrb[0].mxu0 %v416
        %v534 = vpop.f32.mrb[0].mxu0
        %v535 = vadd.f32 %v372, %v534
        %v536 = vpop.f32.mrb[0].mxu0
        %v537 = vadd.f32 %v372, %v536
        %v538 = vpop.f32.mrb[0].mxu0
        %v539 = vpop.f32.mrb[0].mxu0
        %540 = vdwg.mxu0
        %541 = vmatprep.subr.bf16.mxu0 %v405
        %542 = vmatpush1.bf16.msra.mxu0 %v404
        %543 = vmatprep.subr.bf16.mxu0 0
        %544 = vmatpush1.bf16.msra.mxu0 0
        %545 = vmatprep.subr.bf16.mxu0 0
        %546 = vmatpush1.bf16.msra.mxu0 0
        %547 = vmatprep.subr.bf16.mxu0 0
        %548 = vmatpush1.bf16.msra.mxu0 0
        %549 = vmatprep.subr.bf16.mxu0 0
        %550 = vmatpush1.bf16.msra.mxu0 0
        %551 = vmatprep.subr.bf16.mxu0 0
        %552 = vmatpush1.bf16.msra.mxu0 0
        %553 = vmatprep.subr.bf16.mxu0 0
        %554 = vmatpush1.bf16.msra.mxu0 0
        %555 = vmatprep.subr.bf16.mxu0 0
        %556 = vmatpush1.bf16.msra.mxu0 0
        %557 = vmatprep.subr.bf16.mxu0 0
        %558 = vmatpush1.bf16.msra.mxu0 0
        %559 = vmatprep.subr.bf16.mxu0 0
        %560 = vmatpush1.bf16.msra.mxu0 0
        %561 = vmatprep.subr.bf16.mxu0 0
        %562 = vmatpush1.bf16.msra.mxu0 0
        %563 = vmatprep.subr.bf16.mxu0 0
        %564 = vmatpush1.bf16.msra.mxu0 0
        %565 = vmatprep.subr.bf16.mxu0 0
        %566 = vmatpush1.bf16.msra.mxu0 0
        %567 = vmatprep.subr.bf16.mxu0 0
        %568 = vmatpush1.bf16.msra.mxu0 0
        %569 = vmatprep.subr.bf16.mxu0 0
        %570 = vmatpush1.bf16.msra.mxu0 0
        %571 = vmatprep.subr.bf16.mxu0 0
        %572 = vmatpush1.bf16.msra.mxu0 0
        %573 = vmatprep.mubr.bf16.mxu0 0
        %574 = vmatmul.mubr.bf16.gmra.mrb[0].mxu0 %v416
        %v575 = vpop.f32.mrb[0].mxu0
        %v576 = vadd.f32 %v372, %v575
        %v577 = vpop.f32.mrb[0].mxu0
        %v578 = vadd.f32 %v372, %v577
        %v579 = vpop.f32.mrb[0].mxu0
        %v580 = vpop.f32.mrb[0].mxu0
        %581 = vdwg.mxu0
        %v582 = vpack.c.bf16 %v453, %v453
        %v583 = vpack.c.bf16 %v455, %v455
        %v584 = vpack.c.bf16 %v494, %v494
        %v585 = vpack.c.bf16 %v496, %v496
        %v586 = vpack.c.bf16 %v535, %v535
        %v587 = vpack.c.bf16 %v537, %v537
        %v588 = vpack.c.bf16 %v576, %v576
        %v589 = vpack.c.bf16 %v578, %v578
        %v590 = vld [vmem:[%s5] sm:$0xff]
        %592 = vset.pattern.permute.xlu0 0
        %593 = vperm.xlu0 %592, %v590
        %v594 = vpop.permute.xlu0 %593
        %vm596 = vcmask 31744
        %v598 = vsel %vm596, %v365, 0
        %vm600 = vcmask 1041408
        %v602 = vsel %vm600, %v582, 0
        %v605 = vsel %vm600, %v583, 0
        %v608 = vsel %vm600, %v584, 0
        %v611 = vsel %vm600, %v585, 0
        %v614 = vsel %vm600, %v586, 0
        %v617 = vsel %vm600, %v587, 0
        %v620 = vsel %vm600, %v588, 0
        %v623 = vsel %vm600, %v589, 0
        %625 = vmatprep.subr.bf16.mxu0 %v605
        %626 = vmatpush1.bf16.msra.mxu0 %v602
        %627 = vmatprep.subr.bf16.mxu0 0
        %628 = vmatpush1.bf16.msra.mxu0 0
        %629 = vmatprep.subr.bf16.mxu0 0
        %630 = vmatpush1.bf16.msra.mxu0 0
        %631 = vmatprep.subr.bf16.mxu0 0
        %632 = vmatpush1.bf16.msra.mxu0 0
        %633 = vmatprep.subr.bf16.mxu0 0
        %634 = vmatpush1.bf16.msra.mxu0 0
        %635 = vmatprep.subr.bf16.mxu0 0
        %636 = vmatpush1.bf16.msra.mxu0 0
        %637 = vmatprep.subr.bf16.mxu0 0
        %638 = vmatpush1.bf16.msra.mxu0 0
        %639 = vmatprep.subr.bf16.mxu0 0
        %640 = vmatpush1.bf16.msra.mxu0 0
        %641 = vmatprep.subr.bf16.mxu0 0
        %642 = vmatpush1.bf16.msra.mxu0 0
        %643 = vmatprep.subr.bf16.mxu0 0
        %644 = vmatpush1.bf16.msra.mxu0 0
        %645 = vmatprep.subr.bf16.mxu0 0
        %646 = vmatpush1.bf16.msra.mxu0 0
        %647 = vmatprep.subr.bf16.mxu0 0
        %648 = vmatpush1.bf16.msra.mxu0 0
        %649 = vmatprep.subr.bf16.mxu0 0
        %650 = vmatpush1.bf16.msra.mxu0 0
        %651 = vmatprep.subr.bf16.mxu0 0
        %652 = vmatpush1.bf16.msra.mxu0 0
        %653 = vmatprep.subr.bf16.mxu0 0
        %654 = vmatpush1.bf16.msra.mxu0 0
        %655 = vmatprep.subr.bf16.mxu0 0
        %656 = vmatpush1.bf16.msra.mxu0 0
        %657 = vmatprep.mubr.bf16.mxu0 0
        %658 = vmatmul.mubr.bf16.gmra.mrb[0].mxu0 %v598
        %v659 = vpop.f32.mrb[0].mxu0
        %v660 = vadd.f32 %v594, %v659
        %v661 = vpop.f32.mrb[0].mxu0
        %v662 = vadd.f32 %v594, %v661
        %v663 = vpop.f32.mrb[0].mxu0
        %v664 = vpop.f32.mrb[0].mxu0
        %665 = vdwg.mxu0
        %666 = vmatprep.subr.bf16.mxu0 %v611
        %667 = vmatpush1.bf16.msra.mxu0 %v608
        %668 = vmatprep.subr.bf16.mxu0 0
        %669 = vmatpush1.bf16.msra.mxu0 0
        %670 = vmatprep.subr.bf16.mxu0 0
        %671 = vmatpush1.bf16.msra.mxu0 0
        %672 = vmatprep.subr.bf16.mxu0 0
        %673 = vmatpush1.bf16.msra.mxu0 0
        %674 = vmatprep.subr.bf16.mxu0 0
        %675 = vmatpush1.bf16.msra.mxu0 0
        %676 = vmatprep.subr.bf16.mxu0 0
        %677 = vmatpush1.bf16.msra.mxu0 0
        %678 = vmatprep.subr.bf16.mxu0 0
        %679 = vmatpush1.bf16.msra.mxu0 0
        %680 = vmatprep.subr.bf16.mxu0 0
        %681 = vmatpush1.bf16.msra.mxu0 0
        %682 = vmatprep.subr.bf16.mxu0 0
        %683 = vmatpush1.bf16.msra.mxu0 0
        %684 = vmatprep.subr.bf16.mxu0 0
        %685 = vmatpush1.bf16.msra.mxu0 0
        %686 = vmatprep.subr.bf16.mxu0 0
        %687 = vmatpush1.bf16.msra.mxu0 0
        %688 = vmatprep.subr.bf16.mxu0 0
        %689 = vmatpush1.bf16.msra.mxu0 0
        %690 = vmatprep.subr.bf16.mxu0 0
        %691 = vmatpush1.bf16.msra.mxu0 0
        %692 = vmatprep.subr.bf16.mxu0 0
        %693 = vmatpush1.bf16.msra.mxu0 0
        %694 = vmatprep.subr.bf16.mxu0 0
        %695 = vmatpush1.bf16.msra.mxu0 0
        %696 = vmatprep.subr.bf16.mxu0 0
        %697 = vmatpush1.bf16.msra.mxu0 0
        %698 = vmatprep.mubr.bf16.mxu0 0
        %699 = vmatmul.mubr.bf16.gmra.mrb[0].mxu0 %v598
        %v700 = vpop.f32.mrb[0].mxu0
        %v701 = vadd.f32 %v594, %v700
        %v702 = vpop.f32.mrb[0].mxu0
        %v703 = vadd.f32 %v594, %v702
        %v704 = vpop.f32.mrb[0].mxu0
        %v705 = vpop.f32.mrb[0].mxu0
        %706 = vdwg.mxu0
        %707 = vmatprep.subr.bf16.mxu0 %v617
        %708 = vmatpush1.bf16.msra.mxu0 %v614
        %709 = vmatprep.subr.bf16.mxu0 0
        %710 = vmatpush1.bf16.msra.mxu0 0
        %711 = vmatprep.subr.bf16.mxu0 0
        %712 = vmatpush1.bf16.msra.mxu0 0
        %713 = vmatprep.subr.bf16.mxu0 0
        %714 = vmatpush1.bf16.msra.mxu0 0
        %715 = vmatprep.subr.bf16.mxu0 0
        %716 = vmatpush1.bf16.msra.mxu0 0
        %717 = vmatprep.subr.bf16.mxu0 0
        %718 = vmatpush1.bf16.msra.mxu0 0
        %719 = vmatprep.subr.bf16.mxu0 0
        %720 = vmatpush1.bf16.msra.mxu0 0
        %721 = vmatprep.subr.bf16.mxu0 0
        %722 = vmatpush1.bf16.msra.mxu0 0
        %723 = vmatprep.subr.bf16.mxu0 0
        %724 = vmatpush1.bf16.msra.mxu0 0
        %725 = vmatprep.subr.bf16.mxu0 0
        %726 = vmatpush1.bf16.msra.mxu0 0
        %727 = vmatprep.subr.bf16.mxu0 0
        %728 = vmatpush1.bf16.msra.mxu0 0
        %729 = vmatprep.subr.bf16.mxu0 0
        %730 = vmatpush1.bf16.msra.mxu0 0
        %731 = vmatprep.subr.bf16.mxu0 0
        %732 = vmatpush1.bf16.msra.mxu0 0
        %733 = vmatprep.subr.bf16.mxu0 0
        %734 = vmatpush1.bf16.msra.mxu0 0
        %735 = vmatprep.subr.bf16.mxu0 0
        %736 = vmatpush1.bf16.msra.mxu0 0
        %737 = vmatprep.subr.bf16.mxu0 0
        %738 = vmatpush1.bf16.msra.mxu0 0
        %739 = vmatprep.mubr.bf16.mxu0 0
        %740 = vmatmul.mubr.bf16.gmra.mrb[0].mxu0 %v598
        %v741 = vpop.f32.mrb[0].mxu0
        %v742 = vadd.f32 %v594, %v741
        %v743 = vpop.f32.mrb[0].mxu0
        %v744 = vadd.f32 %v594, %v743
        %v745 = vpop.f32.mrb[0].mxu0
        %v746 = vpop.f32.mrb[0].mxu0
        %747 = vdwg.mxu0
        %748 = vmatprep.subr.bf16.mxu0 %v623
        %749 = vmatpush1.bf16.msra.mxu0 %v620
        %750 = vmatprep.subr.bf16.mxu0 0
        %751 = vmatpush1.bf16.msra.mxu0 0
        %752 = vmatprep.subr.bf16.mxu0 0
        %753 = vmatpush1.bf16.msra.mxu0 0
        %754 = vmatprep.subr.bf16.mxu0 0
        %755 = vmatpush1.bf16.msra.mxu0 0
        %756 = vmatprep.subr.bf16.mxu0 0
        %757 = vmatpush1.bf16.msra.mxu0 0
        %758 = vmatprep.subr.bf16.mxu0 0
        %759 = vmatpush1.bf16.msra.mxu0 0
        %760 = vmatprep.subr.bf16.mxu0 0
        %761 = vmatpush1.bf16.msra.mxu0 0
        %762 = vmatprep.subr.bf16.mxu0 0
        %763 = vmatpush1.bf16.msra.mxu0 0
        %764 = vmatprep.subr.bf16.mxu0 0
        %765 = vmatpush1.bf16.msra.mxu0 0
        %766 = vmatprep.subr.bf16.mxu0 0
        %767 = vmatpush1.bf16.msra.mxu0 0
        %768 = vmatprep.subr.bf16.mxu0 0
        %769 = vmatpush1.bf16.msra.mxu0 0
        %770 = vmatprep.subr.bf16.mxu0 0
        %771 = vmatpush1.bf16.msra.mxu0 0
        %772 = vmatprep.subr.bf16.mxu0 0
        %773 = vmatpush1.bf16.msra.mxu0 0
        %774 = vmatprep.subr.bf16.mxu0 0
        %775 = vmatpush1.bf16.msra.mxu0 0
        %776 = vmatprep.subr.bf16.mxu0 0
        %777 = vmatpush1.bf16.msra.mxu0 0
        %778 = vmatprep.subr.bf16.mxu0 0
        %779 = vmatpush1.bf16.msra.mxu0 0
        %780 = vmatprep.mubr.bf16.mxu0 0
        %781 = vmatmul.mubr.bf16.gmra.mrb[0].mxu0 %v598
        %v782 = vpop.f32.mrb[0].mxu0
        %v783 = vadd.f32 %v594, %v782
        %v784 = vpop.f32.mrb[0].mxu0
        %v785 = vadd.f32 %v594, %v784
        %v786 = vpop.f32.mrb[0].mxu0
        %v787 = vpop.f32.mrb[0].mxu0
        %788 = vdwg.mxu0
        %v789 = vrot.slane %v660, 4
        %v790 = vmax.f32 %v660, %v789
        %v791 = vrot.slane %v790, 2
        %v792 = vmax.f32 %v790, %v791
        %v793 = vrot.slane %v792, 1
        %v794 = vmax.f32 %v792, %v793
        %v795 = vrot.slane %v662, 4
        %v796 = vmax.f32 %v662, %v795
        %v797 = vrot.slane %v796, 2
        %v798 = vmax.f32 %v796, %v797
        %v799 = vrot.slane %v798, 1
        %v800 = vmax.f32 %v798, %v799
        %v801 = vrot.slane %v701, 4
        %v802 = vmax.f32 %v701, %v801
        %v803 = vrot.slane %v802, 2
        %v804 = vmax.f32 %v802, %v803
        %v805 = vrot.slane %v804, 1
        %v806 = vmax.f32 %v804, %v805
        %v807 = vrot.slane %v703, 4
        %v808 = vmax.f32 %v703, %v807
        %v809 = vrot.slane %v808, 2
        %v810 = vmax.f32 %v808, %v809
        %v811 = vrot.slane %v810, 1
        %v812 = vmax.f32 %v810, %v811
        %v813 = vrot.slane %v742, 4
        %v814 = vmax.f32 %v742, %v813
        %v815 = vrot.slane %v814, 2
        %v816 = vmax.f32 %v814, %v815
        %v817 = vrot.slane %v816, 1
        %v818 = vmax.f32 %v816, %v817
        %v819 = vrot.slane %v744, 4
        %v820 = vmax.f32 %v744, %v819
        %v821 = vrot.slane %v820, 2
        %v822 = vmax.f32 %v820, %v821
        %v823 = vrot.slane %v822, 1
        %v824 = vmax.f32 %v822, %v823
        %v825 = vrot.slane %v783, 4
        %v826 = vmax.f32 %v783, %v825
        %v827 = vrot.slane %v826, 2
        %v828 = vmax.f32 %v826, %v827
        %v829 = vrot.slane %v828, 1
        %v830 = vmax.f32 %v828, %v829
        %v831 = vrot.slane %v785, 4
        %v832 = vmax.f32 %v785, %v831
        %v833 = vrot.slane %v832, 2
        %v834 = vmax.f32 %v832, %v833
        %v835 = vrot.slane %v834, 1
        %v836 = vmax.f32 %v834, %v835
        %v837 = vsub.f32 %v660, %v794
        %v838 = vsub.f32 %v662, %v800
        %v839 = vsub.f32 %v701, %v806
        %v840 = vsub.f32 %v703, %v812
        %v841 = vsub.f32 %v742, %v818
        %v842 = vsub.f32 %v744, %v824
        %v843 = vsub.f32 %v783, %v830
        %v844 = vsub.f32 %v785, %v836
        %v845 = vmul.f32 %v837, 1.442695
        %v846 = vpow.pop %v845
        %v847 = vmul.f32 %v838, 1.442695
        %v848 = vpow.pop %v847
        %v849 = vmul.f32 %v839, 1.442695
        %v850 = vpow.pop %v849
        %v851 = vmul.f32 %v840, 1.442695
        %v852 = vpow.pop %v851
        %v853 = vmul.f32 %v841, 1.442695
        %v854 = vpow.pop %v853
        %v855 = vmul.f32 %v842, 1.442695
        %v856 = vpow.pop %v855
        %v857 = vmul.f32 %v843, 1.442695
        %v858 = vpow.pop %v857
        %v859 = vmul.f32 %v844, 1.442695
        %v860 = vpow.pop %v859
        %v861 = vrot.slane %v846, 4
        %v862 = vadd.f32 %v846, %v861
        %v863 = vrot.slane %v862, 2
        %v864 = vadd.f32 %v862, %v863
        %v865 = vrot.slane %v864, 1
        %v866 = vadd.f32 %v864, %v865
        %v867 = vrot.slane %v848, 4
        %v868 = vadd.f32 %v848, %v867
        %v869 = vrot.slane %v868, 2
        %v870 = vadd.f32 %v868, %v869
        %v871 = vrot.slane %v870, 1
        %v872 = vadd.f32 %v870, %v871
        %v873 = vrot.slane %v850, 4
        %v874 = vadd.f32 %v850, %v873
        %v875 = vrot.slane %v874, 2
        %v876 = vadd.f32 %v874, %v875
        %v877 = vrot.slane %v876, 1
        %v878 = vadd.f32 %v876, %v877
        %v879 = vrot.slane %v852, 4
        %v880 = vadd.f32 %v852, %v879
        %v881 = vrot.slane %v880, 2
        %v882 = vadd.f32 %v880, %v881
        %v883 = vrot.slane %v882, 1
        %v884 = vadd.f32 %v882, %v883
        %v885 = vrot.slane %v854, 4
        %v886 = vadd.f32 %v854, %v885
        %v887 = vrot.slane %v886, 2
        %v888 = vadd.f32 %v886, %v887
        %v889 = vrot.slane %v888, 1
        %v890 = vadd.f32 %v888, %v889
        %v891 = vrot.slane %v856, 4
        %v892 = vadd.f32 %v856, %v891
        %v893 = vrot.slane %v892, 2
        %v894 = vadd.f32 %v892, %v893
        %v895 = vrot.slane %v894, 1
        %v896 = vadd.f32 %v894, %v895
        %v897 = vrot.slane %v858, 4
        %v898 = vadd.f32 %v858, %v897
        %v899 = vrot.slane %v898, 2
        %v900 = vadd.f32 %v898, %v899
        %v901 = vrot.slane %v900, 1
        %v902 = vadd.f32 %v900, %v901
        %v903 = vrot.slane %v860, 4
        %v904 = vadd.f32 %v860, %v903
        %v905 = vrot.slane %v904, 2
        %v906 = vadd.f32 %v904, %v905
        %v907 = vrot.slane %v906, 1
        %v908 = vadd.f32 %v906, %v907
        %v909 = vrcp.pop %v866
        %v910 = vrcp.pop %v872
        %v911 = vrcp.pop %v878
        %v912 = vrcp.pop %v884
        %v913 = vrcp.pop %v890
        %v914 = vrcp.pop %v896
        %v915 = vrcp.pop %v902
        %v916 = vrcp.pop %v908
        %v917 = vmul.f32 %v846, %v909
        %v918 = vmul.f32 %v848, %v910
        %v919 = vmul.f32 %v850, %v911
        %v920 = vmul.f32 %v852, %v912
        %v921 = vmul.f32 %v854, %v913
        %v922 = vmul.f32 %v856, %v914
        %v923 = vmul.f32 %v858, %v915
        %v924 = vmul.f32 %v860, %v916
        %v925 = vpack.c.bf16 %v917, %v917
        %v926 = vpack.c.bf16 %v918, %v918
        %v927 = vpack.c.bf16 %v919, %v919
        %v928 = vpack.c.bf16 %v920, %v920
        %v929 = vpack.c.bf16 %v921, %v921
        %v930 = vpack.c.bf16 %v922, %v922
        %v931 = vpack.c.bf16 %v923, %v923
        %v932 = vpack.c.bf16 %v924, %v924
        %v935 = vunpack.c.l.b16 %v366
        %v936 = vunpack.c.l.b16 %v367
        %v937 = vpack.c.b16 %v936, %v935
        %vm938 = vcmask 64512
        %v940 = vsel %vm938, %v937, 0
        %vm942 = vcmask 1043456
        %v944 = vsel %vm942, %v925, 0
        %v947 = vsel %vm942, %v926, 0
        %v950 = vsel %vm942, %v927, 0
        %v953 = vsel %vm942, %v928, 0
        %v956 = vsel %vm942, %v929, 0
        %v959 = vsel %vm942, %v930, 0
        %v962 = vsel %vm942, %v931, 0
        %v965 = vsel %vm942, %v932, 0
        %967 = vmatprep.subr.bf16.mxu0 %v947
        %968 = vmatpush1.bf16.msra.mxu0 %v944
        %969 = vmatprep.subr.bf16.mxu0 0
        %970 = vmatpush1.bf16.msra.mxu0 0
        %971 = vmatprep.subr.bf16.mxu0 0
        %972 = vmatpush1.bf16.msra.mxu0 0
        %973 = vmatprep.subr.bf16.mxu0 0
        %974 = vmatpush1.bf16.msra.mxu0 0
        %975 = vmatprep.subr.bf16.mxu0 0
        %976 = vmatpush1.bf16.msra.mxu0 0
        %977 = vmatprep.subr.bf16.mxu0 0
        %978 = vmatpush1.bf16.msra.mxu0 0
        %979 = vmatprep.subr.bf16.mxu0 0
        %980 = vmatpush1.bf16.msra.mxu0 0
        %981 = vmatprep.subr.bf16.mxu0 0
        %982 = vmatpush1.bf16.msra.mxu0 0
        %983 = vmatprep.subr.bf16.mxu0 0
        %984 = vmatpush1.bf16.msra.mxu0 0
        %985 = vmatprep.subr.bf16.mxu0 0
        %986 = vmatpush1.bf16.msra.mxu0 0
        %987 = vmatprep.subr.bf16.mxu0 0
        %988 = vmatpush1.bf16.msra.mxu0 0
        %989 = vmatprep.subr.bf16.mxu0 0
        %990 = vmatpush1.bf16.msra.mxu0 0
        %991 = vmatprep.subr.bf16.mxu0 0
        %992 = vmatpush1.bf16.msra.mxu0 0
        %993 = vmatprep.subr.bf16.mxu0 0
        %994 = vmatpush1.bf16.msra.mxu0 0
        %995 = vmatprep.subr.bf16.mxu0 0
        %996 = vmatpush1.bf16.msra.mxu0 0
        %997 = vmatprep.subr.bf16.mxu0 0
        %998 = vmatpush1.bf16.msra.mxu0 0
        %999 = vmatprep.mubr.bf16.mxu0 0
        %1000 = vmatmul.mubr.bf16.gmra.mrb[0].mxu0 %v940
        %v1001 = vpop.f32.mrb[0].mxu0
        %v1002 = vadd.f32 0.0, %v1001
        %v1003 = vpop.f32.mrb[0].mxu0
        %v1004 = vadd.f32 0.0, %v1003
        %v1005 = vpop.f32.mrb[0].mxu0
        %v1006 = vadd.f32 0.0, %v1005
        %v1007 = vpop.f32.mrb[0].mxu0
        %v1008 = vadd.f32 0.0, %v1007
        %1009 = vdwg.mxu0
        %1010 = vmatprep.subr.bf16.mxu0 %v953
        %1011 = vmatpush1.bf16.msra.mxu0 %v950
        %1012 = vmatprep.subr.bf16.mxu0 0
        %1013 = vmatpush1.bf16.msra.mxu0 0
        %1014 = vmatprep.subr.bf16.mxu0 0
        %1015 = vmatpush1.bf16.msra.mxu0 0
        %1016 = vmatprep.subr.bf16.mxu0 0
        %1017 = vmatpush1.bf16.msra.mxu0 0
        %1018 = vmatprep.subr.bf16.mxu0 0
        %1019 = vmatpush1.bf16.msra.mxu0 0
        %1020 = vmatprep.subr.bf16.mxu0 0
        %1021 = vmatpush1.bf16.msra.mxu0 0
        %1022 = vmatprep.subr.bf16.mxu0 0
        %1023 = vmatpush1.bf16.msra.mxu0 0
        %1024 = vmatprep.subr.bf16.mxu0 0
        %1025 = vmatpush1.bf16.msra.mxu0 0
        %1026 = vmatprep.subr.bf16.mxu0 0
        %1027 = vmatpush1.bf16.msra.mxu0 0
        %1028 = vmatprep.subr.bf16.mxu0 0
        %1029 = vmatpush1.bf16.msra.mxu0 0
        %1030 = vmatprep.subr.bf16.mxu0 0
        %1031 = vmatpush1.bf16.msra.mxu0 0
        %1032 = vmatprep.subr.bf16.mxu0 0
        %1033 = vmatpush1.bf16.msra.mxu0 0
        %1034 = vmatprep.subr.bf16.mxu0 0
        %1035 = vmatpush1.bf16.msra.mxu0 0
        %1036 = vmatprep.subr.bf16.mxu0 0
        %1037 = vmatpush1.bf16.msra.mxu0 0
        %1038 = vmatprep.subr.bf16.mxu0 0
        %1039 = vmatpush1.bf16.msra.mxu0 0
        %1040 = vmatprep.subr.bf16.mxu0 0
        %1041 = vmatpush1.bf16.msra.mxu0 0
        %1042 = vmatprep.mubr.bf16.mxu0 0
        %1043 = vmatmul.mubr.bf16.gmra.mrb[0].mxu0 %v940
        %v1044 = vpop.f32.mrb[0].mxu0
        %v1045 = vadd.f32 0.0, %v1044
        %v1046 = vpop.f32.mrb[0].mxu0
        %v1047 = vadd.f32 0.0, %v1046
        %v1048 = vpop.f32.mrb[0].mxu0
        %v1049 = vadd.f32 0.0, %v1048
        %v1050 = vpop.f32.mrb[0].mxu0
        %v1051 = vadd.f32 0.0, %v1050
        %1052 = vdwg.mxu0
        %1053 = vmatprep.subr.bf16.mxu0 %v959
        %1054 = vmatpush1.bf16.msra.mxu0 %v956
        %1055 = vmatprep.subr.bf16.mxu0 0
        %1056 = vmatpush1.bf16.msra.mxu0 0
        %1057 = vmatprep.subr.bf16.mxu0 0
        %1058 = vmatpush1.bf16.msra.mxu0 0
        %1059 = vmatprep.subr.bf16.mxu0 0
        %1060 = vmatpush1.bf16.msra.mxu0 0
        %1061 = vmatprep.subr.bf16.mxu0 0
        %1062 = vmatpush1.bf16.msra.mxu0 0
        %1063 = vmatprep.subr.bf16.mxu0 0
        %1064 = vmatpush1.bf16.msra.mxu0 0
        %1065 = vmatprep.subr.bf16.mxu0 0
        %1066 = vmatpush1.bf16.msra.mxu0 0
        %1067 = vmatprep.subr.bf16.mxu0 0
        %1068 = vmatpush1.bf16.msra.mxu0 0
        %1069 = vmatprep.subr.bf16.mxu0 0
        %1070 = vmatpush1.bf16.msra.mxu0 0
        %1071 = vmatprep.subr.bf16.mxu0 0
        %1072 = vmatpush1.bf16.msra.mxu0 0
        %1073 = vmatprep.subr.bf16.mxu0 0
        %1074 = vmatpush1.bf16.msra.mxu0 0
        %1075 = vmatprep.subr.bf16.mxu0 0
        %1076 = vmatpush1.bf16.msra.mxu0 0
        %1077 = vmatprep.subr.bf16.mxu0 0
        %1078 = vmatpush1.bf16.msra.mxu0 0
        %1079 = vmatprep.subr.bf16.mxu0 0
        %1080 = vmatpush1.bf16.msra.mxu0 0
        %1081 = vmatprep.subr.bf16.mxu0 0
        %1082 = vmatpush1.bf16.msra.mxu0 0
        %1083 = vmatprep.subr.bf16.mxu0 0
        %1084 = vmatpush1.bf16.msra.mxu0 0
        %1085 = vmatprep.mubr.bf16.mxu0 0
        %1086 = vmatmul.mubr.bf16.gmra.mrb[0].mxu0 %v940
        %v1087 = vpop.f32.mrb[0].mxu0
        %v1088 = vadd.f32 0.0, %v1087
        %v1089 = vpop.f32.mrb[0].mxu0
        %v1090 = vadd.f32 0.0, %v1089
        %v1091 = vpop.f32.mrb[0].mxu0
        %v1092 = vadd.f32 0.0, %v1091
        %v1093 = vpop.f32.mrb[0].mxu0
        %v1094 = vadd.f32 0.0, %v1093
        %1095 = vdwg.mxu0
        %1096 = vmatprep.subr.bf16.mxu0 %v965
        %1097 = vmatpush1.bf16.msra.mxu0 %v962
        %1098 = vmatprep.subr.bf16.mxu0 0
        %1099 = vmatpush1.bf16.msra.mxu0 0
        %1100 = vmatprep.subr.bf16.mxu0 0
        %1101 = vmatpush1.bf16.msra.mxu0 0
        %1102 = vmatprep.subr.bf16.mxu0 0
        %1103 = vmatpush1.bf16.msra.mxu0 0
        %1104 = vmatprep.subr.bf16.mxu0 0
        %1105 = vmatpush1.bf16.msra.mxu0 0
        %1106 = vmatprep.subr.bf16.mxu0 0
        %1107 = vmatpush1.bf16.msra.mxu0 0
        %1108 = vmatprep.subr.bf16.mxu0 0
        %1109 = vmatpush1.bf16.msra.mxu0 0
        %1110 = vmatprep.subr.bf16.mxu0 0
        %1111 = vmatpush1.bf16.msra.mxu0 0
        %1112 = vmatprep.subr.bf16.mxu0 0
        %1113 = vmatpush1.bf16.msra.mxu0 0
        %1114 = vmatprep.subr.bf16.mxu0 0
        %1115 = vmatpush1.bf16.msra.mxu0 0
        %1116 = vmatprep.subr.bf16.mxu0 0
        %1117 = vmatpush1.bf16.msra.mxu0 0
        %1118 = vmatprep.subr.bf16.mxu0 0
        %1119 = vmatpush1.bf16.msra.mxu0 0
        %1120 = vmatprep.subr.bf16.mxu0 0
        %1121 = vmatpush1.bf16.msra.mxu0 0
        %1122 = vmatprep.subr.bf16.mxu0 0
        %1123 = vmatpush1.bf16.msra.mxu0 0
        %1124 = vmatprep.subr.bf16.mxu0 0
        %1125 = vmatpush1.bf16.msra.mxu0 0
        %1126 = vmatprep.subr.bf16.mxu0 0
        %1127 = vmatpush1.bf16.msra.mxu0 0
        %1128 = vmatprep.mubr.bf16.mxu0 0
        %1129 = vmatmul.mubr.bf16.gmra.mrb[0].mxu0 %v940
        %v1130 = vpop.f32.mrb[0].mxu0
        %v1131 = vadd.f32 0.0, %v1130
        %v1132 = vpop.f32.mrb[0].mxu0
        %v1133 = vadd.f32 0.0, %v1132
        %v1134 = vpop.f32.mrb[0].mxu0
        %v1135 = vadd.f32 0.0, %v1134
        %v1136 = vpop.f32.mrb[0].mxu0
        %v1137 = vadd.f32 0.0, %v1136
        %1138 = vdwg.mxu0
        %s1139 = sld [smem:[#allocation2]]
        %v1140 = vstv %s1139
        %v1141 = vmul.f32 %v1140, %v1002
        %v1142 = vmul.f32 %v1140, %v1004
        %v1143 = vmul.f32 %v1140, %v1045
        %v1144 = vmul.f32 %v1140, %v1047
        %v1145 = vmul.f32 %v1140, %v1088
        %v1146 = vmul.f32 %v1140, %v1090
        %v1147 = vmul.f32 %v1140, %v1131
        %v1148 = vmul.f32 %v1140, %v1133
        %v1149 = vmul.f32 %v1140, %v1006
        %v1150 = vmul.f32 %v1140, %v1008
        %v1151 = vmul.f32 %v1140, %v1049
        %v1152 = vmul.f32 %v1140, %v1051
        %v1153 = vmul.f32 %v1140, %v1092
        %v1154 = vmul.f32 %v1140, %v1094
        %v1155 = vmul.f32 %v1140, %v1135
        %v1156 = vmul.f32 %v1140, %v1137
        %v1157 = vunpack.c.l.bf16 %v356
        %v1158 = vunpack.c.h.bf16 %v356
        %v1159 = vunpack.c.l.bf16 %v357
        %v1160 = vunpack.c.h.bf16 %v357
        %v1161 = vunpack.c.l.bf16 %v358
        %v1162 = vunpack.c.h.bf16 %v358
        %v1163 = vunpack.c.l.bf16 %v359
        %v1164 = vunpack.c.h.bf16 %v359
        %v1165 = vunpack.c.l.bf16 %v360
        %v1166 = vunpack.c.h.bf16 %v360
        %v1167 = vunpack.c.l.bf16 %v361
        %v1168 = vunpack.c.h.bf16 %v361
        %v1169 = vunpack.c.l.bf16 %v362
        %v1170 = vunpack.c.h.bf16 %v362
        %v1171 = vunpack.c.l.bf16 %v363
        %v1172 = vunpack.c.h.bf16 %v363
        %v1173 = vadd.f32 %v1141, %v1157
        %v1174 = vadd.f32 %v1142, %v1158
        %v1175 = vadd.f32 %v1143, %v1159
        %v1176 = vadd.f32 %v1144, %v1160
        %v1177 = vadd.f32 %v1145, %v1161
        %v1178 = vadd.f32 %v1146, %v1162
        %v1179 = vadd.f32 %v1147, %v1163
        %v1180 = vadd.f32 %v1148, %v1164
        %v1181 = vadd.f32 %v1149, %v1165
        %v1182 = vadd.f32 %v1150, %v1166
        %v1183 = vadd.f32 %v1151, %v1167
        %v1184 = vadd.f32 %v1152, %v1168
        %v1185 = vadd.f32 %v1153, %v1169
        %v1186 = vadd.f32 %v1154, %v1170
        %v1187 = vadd.f32 %v1155, %v1171
        %v1188 = vadd.f32 %v1156, %v1172
        %v1189 = vpack.c.bf16 %v1181, %v1173
        %v1190 = vpack.c.bf16 %v1182, %v1174
        %v1191 = vpack.c.bf16 %v1183, %v1175
        %v1192 = vpack.c.bf16 %v1184, %v1176
        %v1193 = vpack.c.bf16 %v1185, %v1177
        %v1194 = vpack.c.bf16 %v1186, %v1178
        %v1195 = vpack.c.bf16 %v1187, %v1179
        %v1196 = vpack.c.bf16 %v1188, %v1180
        %v1205 = vunpack.c.l.b16 %v1189
        %v1206 = vunpack.c.l.b16 %v1190
        %v1207 = vunpack.c.l.b16 %v1191
        %v1208 = vunpack.c.l.b16 %v1192
        %v1209 = vunpack.c.l.b16 %v1193
        %v1210 = vunpack.c.l.b16 %v1194
        %v1211 = vunpack.c.l.b16 %v1195
        %v1212 = vunpack.c.l.b16 %v1196
        %v1213 = vunpack.c.h.b16 %v1189
        %v1214 = vunpack.c.h.b16 %v1190
        %v1215 = vunpack.c.h.b16 %v1191
        %v1216 = vunpack.c.h.b16 %v1192
        %v1217 = vunpack.c.h.b16 %v1193
        %v1218 = vunpack.c.h.b16 %v1194
        %v1219 = vunpack.c.h.b16 %v1195
        %v1220 = vunpack.c.h.b16 %v1196
        %v1221 = vpack.c.b16 %v1206, %v1205
        %v1222 = vpack.c.b16 %v1208, %v1207
        %v1223 = vpack.c.b16 %v1210, %v1209
        %v1224 = vpack.c.b16 %v1212, %v1211
        %v1225 = vpack.c.b16 %v1214, %v1213
        %v1226 = vpack.c.b16 %v1216, %v1215
        %v1227 = vpack.c.b16 %v1218, %v1217
        %v1228 = vpack.c.b16 %v1220, %v1219
        %1237 = vst [vmem:[%s343] sm:$0xff] %v1221
        %1238 = vst [vmem:[%s343 + $0x8] sm:$0xff] %v1222
        %1239 = vst [vmem:[%s343 + $0x10] sm:$0xff] %v1223
        %1240 = vst [vmem:[%s343 + $0x18] sm:$0xff] %v1224
        %1241 = vst [vmem:[%s343 + $0x20] sm:$0xff] %v1225
        %1242 = vst [vmem:[%s343 + $0x28] sm:$0xff] %v1226
        %1243 = vst [vmem:[%s343 + $0x30] sm:$0xff] %v1227
        %1244 = vst [vmem:[%s343 + $0x38] sm:$0xff] %v1228
        %s1245 = sand.u32 %s211, 1
        %s1246 = scalar_lea.sflag [#allocation5], %s1245
        %s1247 = sand.u32 %s211, 1
        %s1248 = smul.addr %s1247, 64
        %s1249 = scalar_lea.vmem [#allocation6], %s1248
        // Predicated region
        $region53: #{tpu_custom_call.1} parent=47 // pred_check
          %p1250 = pneg %p221
        $region54: #{tpu_custom_call.1} parent=47 // pred_check_branch
          %1252 = sbr.rel (%p1250) target = $region56
        $region55: #{tpu_custom_call.1} parent=47 // pred_region
          %s1253 = smul.u32 8, %s30
          %s1255 = ssub.s32 1024, 1024
          %1256 = vsyncadd %s1246, %s1255
          %s1257 = smul.addr %s29, 16
          %s1258 = sadd.s32 %s1253, %s1257
          %s1259 = smul.addr %s1258, 64
          %s1260 = scalar_lea.hbm %s7, %s1259
          %s1261 = sshll.u32 %s1249, 4
          %s1262 = int_to_ptr.vmem [resolvable:$true] %s1261
          %1267 = dma.vmem_to_hbm [thread:$0]  %s1262, 1024, %s1260, %s1246, 512, 512, 32
        $region56: #{tpu_custom_call.1} parent=47 // pred_fallthru
          _
      $region48: #{tpu_custom_call.1} parent=5 // pred_fallthru
        _
      %p1268 = scmp.le.s32.totalorder 2, %s20
      // Predicated region
      $region57: #{tpu_custom_call.1} parent=5 // pred_check
        %p1269 = pneg %p1268
      $region58: #{tpu_custom_call.1} parent=5 // pred_check_branch
        %1271 = sbr.rel (%p1269) target = $region60
      $region59: #{tpu_custom_call.1} parent=5 // pred_region
        %s1272 = ssub.s32 %s20, 2
        // Predicated region
        $region61: #{tpu_custom_call.1} parent=59 // pred_check
          %p1273 = pneg %p227
        $region62: #{tpu_custom_call.1} parent=59 // pred_check_branch
          %1275 = sbr.rel (%p1273) target = $region64
        $region63: #{tpu_custom_call.1} parent=59 // pred_region
          %s1276 = sand.u32 %s212, 1
          %s1277 = scalar_lea.sflag [#allocation5], %s1276
          %s1278 = sand.u32 %s212, 1
          %s1279 = smul.addr %s1278, 64
          %s1280 = scalar_lea.vmem [#allocation6], %s1279
          %1281 = dma.done %s1277, 1024
        $region64: #{tpu_custom_call.1} parent=59 // pred_fallthru
          _
      $region60: #{tpu_custom_call.1} parent=5 // pred_fallthru
        _
    $region6: #{tpu_custom_call.1} parent=1 // loop_footer
      %s24 = sadd.s32 1, %s20
    $region7: #{tpu_custom_call.1} parent=1 // loop_footer_branch
      %19 = sbr.rel target = $region3
    $region8: #{tpu_custom_call.1} parent=1 // loop_exit
      _
    %1282 = vsyncpa [#allocation4], 1
    %s1283 = scalar_lea.sflag [#allocation4], 1
    %1284 = vsyncpa %s1283, 1
    %1285 = vsyncpa [#allocation5], 1
    %s1286 = scalar_lea.sflag [#allocation5], 1
    %1287 = vsyncpa %s1286, 1

</llo_original>
